<compile_context>
chip_gen: v5e
topology: v5e:2x2
jax: 0.10.0
libtpu: 0.0.40
codegen_flags: <defaults>
</compile_context>

<pallas_src>
import jax
import jax.numpy as jnp
from jax.experimental import pallas as pl
from jax.experimental.pallas import tpu as pltpu

_SUBLANE = 8


def _round_up(x, m):
    return ((x + m - 1) // m) * m


def view_selector_kernel(x_ref, w1_ref, b1_ref, w2_ref, b2_ref, out_ref):
    # x:  (TB, state_dim)    w1: (state_dim, hidden)   b1: (1, hidden)     f32
    # w2: (hidden, n_views)  b2: (1, n_views)  f32     out: (TB, n_views)  f32
    x = x_ref[...]

    # Linear 1 (MXU, f32 accumulate) + bias + ReLU.  Elementwise path in f32.
    h = jnp.dot(x, w1_ref[...], preferred_element_type=jnp.float32) + b1_ref[...]
    h = jnp.maximum(h, 0.0)

    # Linear 2 -> logits over the (narrow) view axis.
    logits = (
        jnp.dot(h.astype(w2_ref.dtype), w2_ref[...],
                preferred_element_type=jnp.float32)
        + b2_ref[...]
    )

    # Numerically-stable softmax over the last dim.  Exact divide so rows sum
    # to 1 to f32 precision (required by downstream multinomial / log_prob).
    m = jnp.max(logits, axis=-1, keepdims=True)
    e = jnp.exp(logits - m)
    denom = jnp.sum(e, axis=-1, keepdims=True)
    out_ref[...] = (e / denom).astype(out_ref.dtype)


def view_selector_forward(state, w1, b1, w2, b2, *, batch_tile=None, use_bf16=False):
    B, state_dim = state.shape
    hidden_dim = w1.shape[1]
    num_views = w2.shape[1]

    # --- batch tiling ----------------------------------------------------------
    if batch_tile is None:
        if B <= 2048:
            # One grid step: amortizes per-step pipeline overhead for modest B.
            batch_tile = _round_up(max(B, _SUBLANE), _SUBLANE)
        else:
            # >= ~8 grid steps (>=4 per TC on v7x megacore), tile in [2048, 4096].
            tile = _round_up(pl.cdiv(B, 8), _SUBLANE)
            batch_tile = int(min(4096, max(2048, tile)))
    else:
        batch_tile = _round_up(batch_tile, _SUBLANE)
    Bp = _round_up(B, batch_tile)
    if Bp != B:
        state = jnp.pad(state, ((0, Bp - B), (0, 0)))

    # --- dtype policy ----------------------------------------------------------
    if use_bf16:
        # bf16 matmul operands on v5e/v6e/v7x (halves input-side HBM traffic);
        # accumulation and all elementwise/softmax math stays f32.
        state = state.astype(jnp.bfloat16)
        w1 = w1.astype(jnp.bfloat16)
        w2 = w2.astype(jnp.bfloat16)
    else:
        state = state.astype(jnp.float32)
        w1 = w1.astype(jnp.float32)
        w2 = w2.astype(jnp.float32)
    b1 = b1.astype(jnp.float32).reshape(1, hidden_dim)
    b2 = b2.astype(jnp.float32).reshape(1, num_views)

    grid = (Bp // batch_tile,)
    flops = 2 * Bp * (state_dim * hidden_dim + hidden_dim * num_views)
    bytes_accessed = (
        state.size * state.dtype.itemsize
        + w1.size * w1.dtype.itemsize
        + w2.size * w2.dtype.itemsize
        + b1.size * 4
        + b2.size * 4
        + Bp * num_views * 4
    )

    out = pl.pallas_call(
        view_selector_kernel,
        out_shape=jax.ShapeDtypeStruct((Bp, num_views), jnp.float32),
        grid_spec=pltpu.PrefetchScalarGridSpec(
            num_scalar_prefetch=0,
            grid=grid,
            in_specs=[
                pl.BlockSpec((batch_tile, state_dim), lambda i: (i, 0)),   # state
                pl.BlockSpec((state_dim, hidden_dim), lambda i: (0, 0)),   # W1 (invariant)
                pl.BlockSpec((1, hidden_dim), lambda i: (0, 0)),           # b1 (invariant)
                pl.BlockSpec((hidden_dim, num_views), lambda i: (0, 0)),   # W2 (invariant)
                pl.BlockSpec((1, num_views), lambda i: (0, 0)),            # b2 (invariant)
            ],
            # Narrow store: last dim == full array dim (legal); 8x fewer output
            # HBM bytes than a 128-lane padded slab + no post-slice pass.
            out_specs=pl.BlockSpec((batch_tile, num_views), lambda i: (i, 0)),
        ),
        compiler_params=pltpu.CompilerParams(
            dimension_semantics=("parallel",),
        ),
        cost_estimate=pl.CostEstimate(
            flops=flops,
            transcendentals=Bp * num_views,  # exp
            bytes_accessed=bytes_accessed,
        ),
    )(state, w1, b1, w2, b2)

    return out[:B] if Bp != B else out


def init_params(key, state_dim, hidden_dim, num_views):
    """Deterministic init mimicking nn.Linear default (uniform +/- 1/sqrt(fan_in))."""
    k1, k2, k3, k4 = jax.random.split(key, 4)
    lim1 = 1.0 / jnp.sqrt(state_dim)
    lim2 = 1.0 / jnp.sqrt(hidden_dim)
    w1 = jax.random.uniform(k1, (state_dim, hidden_dim), jnp.float32, -lim1, lim1)
    b1 = jax.random.uniform(k2, (1, hidden_dim), jnp.float32, -lim1, lim1)
    w2 = jax.random.uniform(k3, (hidden_dim, num_views), jnp.float32, -lim2, lim2)
    b2 = jax.random.uniform(k4, (1, num_views), jnp.float32, -lim2, lim2)
    return w1, b1, w2, b2


def reference_forward(state, w1, b1, w2, b2):
    h = jnp.maximum(state @ w1 + b1, 0.0)
    logits = h @ w2 + b2
    return jax.nn.softmax(logits, axis=-1)


if __name__ == "__main__":
    # Shapes consistent with ViewSelector(state_dim=32, hidden_dim=64,
    # num_views=16, num_select=4), batch=16.
    state_dim, hidden_dim, num_views = 32, 64, 16
    B = 16

    key = jax.random.PRNGKey(0)
    k_state, k_params = jax.random.split(key)
    state = jax.random.normal(k_state, (B, state_dim), jnp.float32)
    w1, b1, w2, b2 = init_params(k_params, state_dim, hidden_dim, num_views)
    ref = reference_forward(state, w1, b1, w2, b2)

    # f32 path (single grid step).
    probs = jax.block_until_ready(view_selector_forward(state, w1, b1, w2, b2))
    assert probs.shape == (B, num_views)
    assert jnp.allclose(jnp.sum(probs, axis=-1), 1.0, atol=1e-5)
    assert jnp.allclose(probs, ref, atol=2e-3)

    # Arbitrary (non-multiple-of-8) batch + multi-step grid via explicit tile.
    probs_odd = jax.block_until_ready(
        view_selector_forward(state[:13], w1, b1, w2, b2, batch_tile=8))
    assert probs_odd.shape == (13, num_views)
    assert jnp.allclose(jnp.sum(probs_odd, axis=-1), 1.0, atol=1e-5)
    assert jnp.allclose(probs_odd, ref[:13], atol=2e-3)

    # bf16 matmul operands (perf mode for v5e/v6e/v7x), f32 elementwise path.
    probs_bf16 = jax.block_until_ready(
        view_selector_forward(state, w1, b1, w2, b2, use_bf16=True))
    assert jnp.allclose(jnp.sum(probs_bf16, axis=-1), 1.0, atol=1e-5)
    assert jnp.allclose(probs_bf16, ref, atol=3e-2)

    # TODO(synk): sample() (torch.multinomial without replacement over G draws)
    # and the gather-based log_prob are host-side control flow in the PyTorch
    # module; for the nominal B=16 workload the right next step is to fuse that
    # top-k/sampling/log-prob gather into this kernel (scores fit in one vreg
    # row), since pallas_call overhead dominates the <1 us of MLP work.

    print("KERNEL_OK")
</pallas_src>

<mosaic_0001>
module attributes {stable_mosaic.version = 11 : i64} {
  func.func @view_selector_kernel(%arg0: i32, %arg1: memref<16x32xf32, #tpu.memory_space<vmem>>, %arg2: memref<32x64xf32, #tpu.memory_space<vmem>>, %arg3: memref<1x64xf32, #tpu.memory_space<vmem>>, %arg4: memref<64x16xf32, #tpu.memory_space<vmem>>, %arg5: memref<1x16xf32, #tpu.memory_space<vmem>>, %arg6: memref<16x16xf32, #tpu.memory_space<vmem>>) attributes {dimension_semantics = [#tpu.dimension_semantics<parallel>], iteration_bounds = array<i64: 1>, scalar_prefetch = 0 : i64, scratch_operands = 0 : i64, tpu.core_type = #tpu.core_type<tc>, window_params = [{transform_indices = @transform_0, window_bounds = array<i64: 16, 32>}, {pipeline_mode = #tpu.pipeline_mode<synchronous>, transform_indices = @transform_1, window_bounds = array<i64: 32, 64>}, {pipeline_mode = #tpu.pipeline_mode<synchronous>, transform_indices = @transform_2, window_bounds = array<i64: 1, 64>}, {pipeline_mode = #tpu.pipeline_mode<synchronous>, transform_indices = @transform_3, window_bounds = array<i64: 64, 16>}, {pipeline_mode = #tpu.pipeline_mode<synchronous>, transform_indices = @transform_4, window_bounds = array<i64: 1, 16>}, {transform_indices = @transform_5, window_bounds = array<i64: 16, 16>}]} {
    %c0 = arith.constant 0 : index
    %c0_0 = arith.constant 0 : index
    %0 = vector.load %arg1[%c0, %c0_0] : memref<16x32xf32, #tpu.memory_space<vmem>>, vector<16x32xf32>
    %c0_1 = arith.constant 0 : index
    %c0_2 = arith.constant 0 : index
    %1 = vector.load %arg2[%c0_1, %c0_2] : memref<32x64xf32, #tpu.memory_space<vmem>>, vector<32x64xf32>
    %cst = arith.constant dense<0.000000e+00> : vector<16x64xf32>
    %2 = tpu.matmul %0, %1, %cst {dimension_numbers = #tpu.dot_dimension_numbers<[1], [0], [0], [1], [0, 0, 1, 1], [], []>} : vector<16x32xf32>, vector<32x64xf32>, vector<16x64xf32> -> vector<16x64xf32>
    %c0_3 = arith.constant 0 : index
    %c0_4 = arith.constant 0 : index
    %3 = vector.load %arg3[%c0_3, %c0_4] : memref<1x64xf32, #tpu.memory_space<vmem>>, vector<1x64xf32>
    %4 = vector.broadcast %3 : vector<1x64xf32> to vector<16x64xf32>
    %5 = arith.addf %2, %4 : vector<16x64xf32>
    %cst_5 = arith.constant 0.000000e+00 : f32
    %6 = vector.broadcast %cst_5 : f32 to vector<16x64xf32>
    %7 = arith.maximumf %5, %6 : vector<16x64xf32>
    %c0_6 = arith.constant 0 : index
    %c0_7 = arith.constant 0 : index
    %8 = vector.load %arg4[%c0_6, %c0_7] : memref<64x16xf32, #tpu.memory_space<vmem>>, vector<64x16xf32>
    %cst_8 = arith.constant dense<0.000000e+00> : vector<16x16xf32>
    %9 = tpu.matmul %7, %8, %cst_8 {dimension_numbers = #tpu.dot_dimension_numbers<[1], [0], [0], [1], [0, 0, 1, 1], [], []>} : vector<16x64xf32>, vector<64x16xf32>, vector<16x16xf32> -> vector<16x16xf32>
    %c0_9 = arith.constant 0 : index
    %c0_10 = arith.constant 0 : index
    %10 = vector.load %arg5[%c0_9, %c0_10] : memref<1x16xf32, #tpu.memory_space<vmem>>, vector<1x16xf32>
    %11 = vector.broadcast %10 : vector<1x16xf32> to vector<16x16xf32>
    %12 = arith.addf %9, %11 : vector<16x16xf32>
    %cst_11 = arith.constant dense<0xFF800000> : vector<16xf32>
    %13 = vector.multi_reduction <maximumf>, %12, %cst_11 [1] : vector<16x16xf32> to vector<16xf32>
    %14 = vector.shape_cast %13 : vector<16xf32> to vector<16x1xf32>
    %15 = vector.broadcast %14 : vector<16x1xf32> to vector<16x16xf32>
    %16 = arith.subf %12, %15 : vector<16x16xf32>
    %17 = math.exp %16 : vector<16x16xf32>
    %cst_12 = arith.constant dense<0.000000e+00> : vector<16xf32>
    %18 = vector.multi_reduction <add>, %17, %cst_12 [1] : vector<16x16xf32> to vector<16xf32>
    %19 = vector.shape_cast %18 : vector<16xf32> to vector<16x1xf32>
    %20 = vector.broadcast %19 : vector<16x1xf32> to vector<16x16xf32>
    %21 = arith.divf %17, %20 : vector<16x16xf32>
    %c0_13 = arith.constant 0 : index
    %c0_14 = arith.constant 0 : index
    %22 = vector.load %arg6[%c0_13, %c0_14] : memref<16x16xf32, #tpu.memory_space<vmem>>, vector<16x16xf32>
    tpu.vector_store %arg6[%c0_13, %c0_14], %21 {strides = array<i32>} : memref<16x16xf32, #tpu.memory_space<vmem>>, vector<16x16xf32>,
    return
  }
  func.func @transform_0(%arg0: i32) -> (i32, i32) {
    %c0_i32 = arith.constant 0 : i32
    %c0_i32_0 = arith.constant 0 : i32
    return %arg0, %c0_i32 : i32, i32
  }
  func.func @transform_1(%arg0: i32) -> (i32, i32) {
    %c0_i32 = arith.constant 0 : i32
    %c0_i32_0 = arith.constant 0 : i32
    %c0_i32_1 = arith.constant 0 : i32
    return %c0_i32, %c0_i32_0 : i32, i32
  }
  func.func @transform_2(%arg0: i32) -> (i32, i32) {
    %c0_i32 = arith.constant 0 : i32
    %c0_i32_0 = arith.constant 0 : i32
    %c0_i32_1 = arith.constant 0 : i32
    return %c0_i32, %c0_i32_0 : i32, i32
  }
  func.func @transform_3(%arg0: i32) -> (i32, i32) {
    %c0_i32 = arith.constant 0 : i32
    %c0_i32_0 = arith.constant 0 : i32
    %c0_i32_1 = arith.constant 0 : i32
    return %c0_i32, %c0_i32_0 : i32, i32
  }
  func.func @transform_4(%arg0: i32) -> (i32, i32) {
    %c0_i32 = arith.constant 0 : i32
    %c0_i32_0 = arith.constant 0 : i32
    %c0_i32_1 = arith.constant 0 : i32
    return %c0_i32, %c0_i32_0 : i32, i32
  }
  func.func @transform_5(%arg0: i32) -> (i32, i32) {
    %c0_i32 = arith.constant 0 : i32
    %c0_i32_0 = arith.constant 0 : i32
    return %arg0, %c0_i32 : i32, i32
  }
}

</mosaic_0001>

<llo_original>
// kernel: tpu_custom_call.1
$region0: #{tpu_custom_call.1}
  #allocation0 [shape = 'u32[]', space=smem, size = 0x4, offset = 0x4, fixed_abs, tag = 'smem constant byte address 0x4 - core index']
  #allocation1 [shape = 'u32[72,128]{1,0:T(1,128)}', space=vmem, size = 0x9000, scoped, tag = 'internal scratch']
  %s0 = inlined_call_operand.vmem [shape: f32[16,32], index: 0, kind: input, shape index: {}]
  %s1 = inlined_call_operand.vmem [shape: f32[32,64], index: 1, kind: input, shape index: {}]
  %s2 = inlined_call_operand.vmem [shape: f32[1,64], index: 2, kind: input, shape index: {}]
  %s3 = inlined_call_operand.vmem [shape: f32[64,16], index: 3, kind: input, shape index: {}]
  %s4 = inlined_call_operand.vmem [shape: f32[1,16], index: 4, kind: input, shape index: {}]
  %s5 = inlined_call_operand.hbm [shape: f32[16,16], index: 5, kind: output, shape index: {}]
  %s6 = sld [smem:[#allocation0]]
  $region30: #{tpu_custom_call.1} parent=0
    _
  %s8 = ssub.s32 1, %s6
  %s9 = scalar_select 0, %s8, %s6
  $region1: #{tpu_custom_call.1} parent=0
    #allocation2 [shape = 'u8[8192]{0}', space=vmem, size = 0x2000, scoped, tag = 'output window, operand 0, single buffered']
    #allocation3 [shape = 's32[1]{0}', space=sflag, size = 0x4, scoped, tag = 'scoped memory for tpu_custom_call.1']
    %10 = vsyncpa [#allocation3], 0
    // Predicated region
    $region2: #{tpu_custom_call.1} parent=1 // pred_check
      _
    $region3: #{tpu_custom_call.1} parent=1 // pred_check_branch
      %12 = sbr.rel (0) target = $region5
    $region4: #{tpu_custom_call.1} parent=1 // pred_region
      _
    $region5: #{tpu_custom_call.1} parent=1 // pred_fallthru
      _
    // Predicated region
    $region6: #{tpu_custom_call.1} parent=1 // pred_check
      _
    $region7: #{tpu_custom_call.1} parent=1 // pred_check_branch
      %14 = sbr.rel (0) target = $region9
    $region8: #{tpu_custom_call.1} parent=1 // pred_region
      _
    $region9: #{tpu_custom_call.1} parent=1 // pred_fallthru
      _
    // Predicated region
    $region10: #{tpu_custom_call.1} parent=1 // pred_check
      _
    $region11: #{tpu_custom_call.1} parent=1 // pred_check_branch
      %16 = sbr.rel (0) target = $region13
    $region12: #{tpu_custom_call.1} parent=1 // pred_region
      _
    $region13: #{tpu_custom_call.1} parent=1 // pred_fallthru
      _
    // Predicated region
    $region14: #{tpu_custom_call.1} parent=1 // pred_check
      _
    $region15: #{tpu_custom_call.1} parent=1 // pred_check_branch
      %18 = sbr.rel (0) target = $region17
    $region16: #{tpu_custom_call.1} parent=1 // pred_region
      _
    $region17: #{tpu_custom_call.1} parent=1 // pred_fallthru
      _
    // Predicated region
    $region18: #{tpu_custom_call.1} parent=1 // pred_check
      _
    $region19: #{tpu_custom_call.1} parent=1 // pred_check_branch
      %20 = sbr.rel (0) target = $region21
    $region20: #{tpu_custom_call.1} parent=1 // pred_region
      _
    $region21: #{tpu_custom_call.1} parent=1 // pred_fallthru
      _
    %v21 = vld [vmem:[%s0] sm:$0xff]
    %v22 = vld [vmem:[%s0 + $0x8] sm:$0xff]
    %v23 = vld [vmem:[%s1] sm:$0xff]
    %v24 = vld [vmem:[%s1 + $0x8] sm:$0xff]
    %v25 = vld [vmem:[%s1 + $0x10] sm:$0xff]
    %v26 = vld [vmem:[%s1 + $0x18] sm:$0xff]
    %v27 = vld [vmem:[%s2] sm:$0x1]
    %v29 = vperm.slane %v27, 0
    %vm31 = vcmask 261120
    %v33 = vsel %vm31, %v21, 0
    %v36 = vsel %vm31, %v22, 0
    %38 = vmatpush.msra.mxu0 0.0
    %39 = vmatpush.msra.mxu0 0.0
    %40 = vmatpush.msra.mxu0 0.0
    %41 = vmatpush.msra.mxu0 0.0
    %42 = vmatpush.msra.mxu0 0.0
    %43 = vmatpush.msra.mxu0 0.0
    %44 = vmatpush.msra.mxu0 0.0
    %45 = vmatpush.msra.mxu0 0.0
    %46 = vmatpush.msra.mxu0 0.0
    %47 = vmatpush.msra.mxu0 0.0
    %48 = vmatpush.msra.mxu0 0.0
    %49 = vmatpush.msra.mxu0 0.0
    %50 = vmatpush.msra.mxu0 %v26
    %51 = vmatpush.msra.mxu0 %v25
    %52 = vmatpush.msra.mxu0 %v24
    %53 = vmatpush.msra.mxu0 %v23
    %54 = vmatmul.f32.gmra.mxu0 %v33
    %v55 = vpop.f32.mrf.mxu0
    %v56 = vadd.f32 %v29, %v55
    %57 = vmatmul.f32.gmra.mxu0 %v36
    %v58 = vpop.f32.mrf.mxu0
    %v59 = vadd.f32 %v29, %v58
    %60 = vdwg.mxu0
    %v61 = vmax.f32 %v56, 0.0
    %v62 = vmax.f32 %v59, 0.0
    %v63 = vld [vmem:[%s3] sm:$0xff]
    %v64 = vld [vmem:[%s3 + $0x8] sm:$0xff]
    %v65 = vld [vmem:[%s3 + $0x10] sm:$0xff]
    %v66 = vld [vmem:[%s3 + $0x18] sm:$0xff]
    %v67 = vld [vmem:[%s3 + $0x20] sm:$0xff]
    %v68 = vld [vmem:[%s3 + $0x28] sm:$0xff]
    %v69 = vld [vmem:[%s3 + $0x30] sm:$0xff]
    %v70 = vld [vmem:[%s3 + $0x38] sm:$0xff]
    %v71 = vld [vmem:[%s4] sm:$0x1]
    %v73 = vperm.slane %v71, 0
    %vm75 = vcmask 523264
    %v77 = vsel %vm75, %v61, 0
    %v80 = vsel %vm75, %v62, 0
    %82 = vmatpush.msra.mxu0 0.0
    %83 = vmatpush.msra.mxu0 0.0
    %84 = vmatpush.msra.mxu0 0.0
    %85 = vmatpush.msra.mxu0 0.0
    %86 = vmatpush.msra.mxu0 0.0
    %87 = vmatpush.msra.mxu0 0.0
    %88 = vmatpush.msra.mxu0 0.0
    %89 = vmatpush.msra.mxu0 0.0
    %90 = vmatpush.msra.mxu0 %v70
    %91 = vmatpush.msra.mxu0 %v69
    %92 = vmatpush.msra.mxu0 %v68
    %93 = vmatpush.msra.mxu0 %v67
    %94 = vmatpush.msra.mxu0 %v66
    %95 = vmatpush.msra.mxu0 %v65
    %96 = vmatpush.msra.mxu0 %v64
    %97 = vmatpush.msra.mxu0 %v63
    %98 = vmatmul.f32.gmra.mxu0 %v77
    %v99 = vpop.f32.mrf.mxu0
    %v100 = vadd.f32 %v73, %v99
    %101 = vmatmul.f32.gmra.mxu0 %v80
    %v102 = vpop.f32.mrf.mxu0
    %v103 = vadd.f32 %v73, %v102
    %104 = vdwg.mxu0
    %vm105 = vcmask 130048
    %v106 = vsel %vm105, %v100, -inf
    %107 = vmax.xlane.f32.xlu0 %v106
    %v108 = vpop.xlane.xlu0 %107
    %v109 = vsel %vm105, %v103, -inf
    %110 = vmax.xlane.f32.xlu0 %v109
    %v111 = vpop.xlane.xlu0 %110
    %v112 = vsub.f32 %v100, %v108
    %v113 = vsub.f32 %v103, %v111
    %v114 = vmul.f32 %v112, 1.442695
    %v115 = vpow.pop %v114
    %v116 = vmul.f32 %v113, 1.442695
    %v117 = vpow.pop %v116
    %v118 = vsel %vm105, %v115, 0.0
    %119 = vadd.xlane.f32.xlu0 %v118
    %v120 = vpop.xlane.xlu0 %119
    %v121 = vsel %vm105, %v117, 0.0
    %122 = vadd.xlane.f32.xlu0 %v121
    %v123 = vpop.xlane.xlu0 %122
    %v124 = vrcp.pop %v120
    %v125 = vmul.f32 %v120, %v124
    %v126 = vsub.f32 1.0, %v125
    %v127 = vmul.f32 %v124, %v126
    %v128 = vadd.f32 %v124, %v127
    %vm129 = vweird.f32 %v120
    %vm130 = vweird.f32 %v124
    %vm131 = vmor %vm129, %vm130
    %v132 = vsel %vm131, %v124, %v128
    %v133 = vand.u32 2147483647, %v120
    %vm134 = vcmp.eq.f32.partialorder %v133, 8.507059e+37
    %v135 = vand.u32 %v120, 2147483648
    %v136 = vor.u32 1.1754944e-38, %v135
    %v137 = vsel %vm134, %v136, %v132
    %v138 = vmul.f32 %v115, %v137
    %v139 = vrcp.pop %v123
    %v140 = vmul.f32 %v123, %v139
    %v141 = vsub.f32 1.0, %v140
    %v142 = vmul.f32 %v139, %v141
    %v143 = vadd.f32 %v139, %v142
    %vm144 = vweird.f32 %v123
    %vm145 = vweird.f32 %v139
    %vm146 = vmor %vm144, %vm145
    %v147 = vsel %vm146, %v139, %v143
    %v148 = vand.u32 2147483647, %v123
    %vm149 = vcmp.eq.f32.partialorder %v148, 8.507059e+37
    %v150 = vand.u32 %v123, 2147483648
    %v151 = vor.u32 1.1754944e-38, %v150
    %v152 = vsel %vm149, %v151, %v147
    %v153 = vmul.f32 %v117, %v152
    %154 = vst.msk [vmem:[#allocation2] sm:$0xff] %vm105, %v138
    %155 = vst.msk [vmem:[#allocation2 + $0x8] sm:$0xff] %vm105, %v153
    // Predicated region
    $region22: #{tpu_custom_call.1} parent=1 // pred_check
      _
    $region23: #{tpu_custom_call.1} parent=1 // pred_check_branch
      %157 = sbr.rel (0) target = $region25
    $region24: #{tpu_custom_call.1} parent=1 // pred_region
      %159 = vsyncadd [#allocation3], 0
      %s160 = sshll.u32 [#allocation2], 4
      %s161 = int_to_ptr.vmem [resolvable:$true] %s160
      %s162 = sshll.u32 %s5, 4
      %s163 = int_to_ptr.hbm [resolvable:$true] %s162
      %168 = dma.vmem_to_hbm [thread:$0]  %s161, 256, %s163, [#allocation3], 128, 128, 8
    $region25: #{tpu_custom_call.1} parent=1 // pred_fallthru
      _
    // Predicated region
    $region26: #{tpu_custom_call.1} parent=1 // pred_check
      _
    $region27: #{tpu_custom_call.1} parent=1 // pred_check_branch
      %170 = sbr.rel (0) target = $region29
    $region28: #{tpu_custom_call.1} parent=1 // pred_region
      %172 = dma.done [#allocation3], 256
    $region29: #{tpu_custom_call.1} parent=1 // pred_fallthru
      _
    %173 = vsyncpa [#allocation3], 1

</llo_original>
